<compile_context>
chip_gen: v7x
topology: tpu7x:2x2x1
jax: 0.10.0
libtpu: 0.0.40
codegen_flags: <defaults>
</compile_context>

<pallas_src>
import functools

import jax
import jax.numpy as jnp
from jax.experimental import pallas as pl
from jax.experimental.pallas import tpu as pltpu


def _round_up(v: int, m: int) -> int:
    return ((v + m - 1) // m) * m


def _linear_pca_kernel(x_ref, wet_ref, be_ref, wdt_ref, bd_ref, o_ref):
    """Fused encoder+decoder on pre-transposed weights.

    x_ref   : (tm, Fp)   input rows
    wet_ref : (Fp, Op)   encoder weight, already transposed (= We^T, padded)
    be_ref  : (1,  Op)   encoder bias (padded)
    wdt_ref : (Op, Fp)   decoder weight, already transposed (= Wd^T, padded)
    bd_ref  : (1,  Fp)   decoder bias (padded)
    o_ref   : (tm, Fp)   output rows
    """
    x = x_ref[...]
    # encoder: (tm, Fp) @ (Fp, Op) -> (tm, Op), accumulate in f32 on the MXU.
    ys = jnp.dot(x, wet_ref[...], preferred_element_type=jnp.float32)
    ys = ys + be_ref[...]
    # decoder: (tm, Op) @ (Op, Fp) -> (tm, Fp). Cast the (small) intermediate
    # back to the weight dtype so the MXU consumes its native input dtype.
    out = jnp.dot(ys.astype(wdt_ref.dtype), wdt_ref[...],
                  preferred_element_type=jnp.float32)
    out = out + bd_ref[...]
    o_ref[...] = out.astype(o_ref.dtype)


@functools.partial(jax.jit, static_argnames=("block_m",))
def linear_pca_forward(xs, w_enc, b_enc, w_dec, b_dec, *, block_m=None):
    """xs: (B, F); w_enc: (O, F); b_enc: (O,); w_dec: (F, O); b_dec: (F,)."""
    B, F = xs.shape
    O = w_enc.shape[0]
    itemsize = jnp.dtype(xs.dtype).itemsize

    # Lane-dense padding of the feature / latent dims.
    Fp = _round_up(F, 128)
    Op = _round_up(O, 128)

    # Batch tile: big enough to feed the MXU / amortize per-step overhead, but
    # collapse to a single block when the batch is small.
    if block_m is None:
        block_m = min(512, _round_up(B, 128))
    Bp = _round_up(B, block_m)

    # One-time HBM-side layout work: transpose + zero-pad. Zeros in the padded
    # rows/cols of weights & biases leave the valid region of the output exact.
    xs_p = jnp.zeros((Bp, Fp), xs.dtype).at[:B, :F].set(xs)
    we_t = jnp.zeros((Fp, Op), w_enc.dtype).at[:F, :O].set(w_enc.T)
    wd_t = jnp.zeros((Op, Fp), w_dec.dtype).at[:O, :F].set(w_dec.T)
    be_p = jnp.zeros((1, Op), b_enc.dtype).at[0, :O].set(b_enc)
    bd_p = jnp.zeros((1, Fp), b_dec.dtype).at[0, :F].set(b_dec)

    grid = (Bp // block_m,)

    # Advisory cost estimate (one pass over x/out, one pass over each weight).
    flops = 2 * Bp * Fp * Op + 2 * Bp * Op * Fp
    bytes_accessed = itemsize * (2 * Bp * Fp + 2 * Fp * Op + Op + Fp)
    cost = pl.CostEstimate(flops=flops, transcendentals=0,
                           bytes_accessed=bytes_accessed)

    # VMEM budget: resident weights + biases + double-buffered x/out tiles.
    vmem_needed = itemsize * (
        2 * Fp * Op + Op + Fp           # resident weights + biases
        + 2 * block_m * Fp              # x tile, double-buffered
        + 2 * block_m * Fp              # out tile, double-buffered
    )
    compiler_kwargs = dict(dimension_semantics=("parallel",))
    if vmem_needed > (28 << 20):
        # Only raise the scoped limit when we actually need it; cap below the
        # smallest physical VMEM (v7x: 64 MiB).
        compiler_kwargs["vmem_limit_bytes"] = min(vmem_needed + (8 << 20),
                                                  48 << 20)

    out_p = pl.pallas_call(
        _linear_pca_kernel,
        out_shape=jax.ShapeDtypeStruct((Bp, Fp), xs.dtype),
        grid_spec=pltpu.PrefetchScalarGridSpec(
            num_scalar_prefetch=0,
            grid=grid,
            in_specs=[
                pl.BlockSpec((block_m, Fp), lambda i: (i, 0)),  # x tile
                pl.BlockSpec((Fp, Op), lambda i: (0, 0)),       # We^T (resident)
                pl.BlockSpec((1, Op), lambda i: (0, 0)),        # be (resident)
                pl.BlockSpec((Op, Fp), lambda i: (0, 0)),       # Wd^T (resident)
                pl.BlockSpec((1, Fp), lambda i: (0, 0)),        # bd (resident)
            ],
            out_specs=pl.BlockSpec((block_m, Fp), lambda i: (i, 0)),
        ),
        compiler_params=pltpu.CompilerParams(**compiler_kwargs),
        cost_estimate=cost,
    )(xs_p, we_t, be_p, wd_t, bd_p)

    return out_p[:B, :F]


def init_linear_params(key, in_features, out_features, dtype=jnp.float32):
    """Deterministic PyTorch-style nn.Linear init: U(-1/sqrt(in), 1/sqrt(in))."""
    kw, kb = jax.random.split(key)
    bound = 1.0 / (in_features ** 0.5)
    w = jax.random.uniform(kw, (out_features, in_features), dtype,
                           minval=-bound, maxval=bound)
    b = jax.random.uniform(kb, (out_features,), dtype,
                           minval=-bound, maxval=bound)
    return w, b


if __name__ == "__main__":
    feature_size = 32
    output_size = 8
    batch = 16

    key = jax.random.PRNGKey(0)
    k_x, k_enc, k_dec = jax.random.split(key, 3)

    xs = jax.random.normal(k_x, (batch, feature_size), jnp.float32)
    w_enc, b_enc = init_linear_params(k_enc, feature_size, output_size)
    w_dec, b_dec = init_linear_params(k_dec, output_size, feature_size)

    out = linear_pca_forward(xs, w_enc, b_enc, w_dec, b_dec)
    jax.block_until_ready(out)

    # Reference check in plain JAX.
    ys_ref = xs @ w_enc.T + b_enc
    out_ref = ys_ref @ w_dec.T + b_dec
    assert out.shape == (batch, feature_size)
    assert jnp.allclose(out, out_ref, atol=1e-5, rtol=1e-5)

    print("KERNEL_OK")
</pallas_src>

<mosaic_0001>
module attributes {stable_mosaic.version = 11 : i64} {
  func.func @_linear_pca_kernel(%arg0: i32, %arg1: memref<128x128xf32, #tpu.memory_space<vmem>>, %arg2: memref<128x128xf32, #tpu.memory_space<vmem>>, %arg3: memref<1x128xf32, #tpu.memory_space<vmem>>, %arg4: memref<128x128xf32, #tpu.memory_space<vmem>>, %arg5: memref<1x128xf32, #tpu.memory_space<vmem>>, %arg6: memref<128x128xf32, #tpu.memory_space<vmem>>) attributes {dimension_semantics = [#tpu.dimension_semantics<parallel>], iteration_bounds = array<i64: 1>, scalar_prefetch = 0 : i64, scratch_operands = 0 : i64, tpu.core_type = #tpu.core_type<tc>, window_params = [{transform_indices = @transform_0, window_bounds = array<i64: 128, 128>}, {pipeline_mode = #tpu.pipeline_mode<synchronous>, transform_indices = @transform_1, window_bounds = array<i64: 128, 128>}, {pipeline_mode = #tpu.pipeline_mode<synchronous>, transform_indices = @transform_2, window_bounds = array<i64: 1, 128>}, {pipeline_mode = #tpu.pipeline_mode<synchronous>, transform_indices = @transform_3, window_bounds = array<i64: 128, 128>}, {pipeline_mode = #tpu.pipeline_mode<synchronous>, transform_indices = @transform_4, window_bounds = array<i64: 1, 128>}, {transform_indices = @transform_5, window_bounds = array<i64: 128, 128>}]} {
    %c0 = arith.constant 0 : index
    %c0_0 = arith.constant 0 : index
    %0 = vector.load %arg1[%c0, %c0_0] : memref<128x128xf32, #tpu.memory_space<vmem>>, vector<128x128xf32>
    %c0_1 = arith.constant 0 : index
    %c0_2 = arith.constant 0 : index
    %1 = vector.load %arg2[%c0_1, %c0_2] : memref<128x128xf32, #tpu.memory_space<vmem>>, vector<128x128xf32>
    %cst = arith.constant dense<0.000000e+00> : vector<128x128xf32>
    %2 = tpu.matmul %0, %1, %cst {dimension_numbers = #tpu.dot_dimension_numbers<[1], [0], [0], [1], [0, 0, 1, 1], [], []>} : vector<128x128xf32>, vector<128x128xf32>, vector<128x128xf32> -> vector<128x128xf32>
    %c0_3 = arith.constant 0 : index
    %c0_4 = arith.constant 0 : index
    %3 = vector.load %arg3[%c0_3, %c0_4] : memref<1x128xf32, #tpu.memory_space<vmem>>, vector<1x128xf32>
    %4 = vector.broadcast %3 : vector<1x128xf32> to vector<128x128xf32>
    %5 = arith.addf %2, %4 : vector<128x128xf32>
    %c0_5 = arith.constant 0 : index
    %c0_6 = arith.constant 0 : index
    %6 = vector.load %arg4[%c0_5, %c0_6] : memref<128x128xf32, #tpu.memory_space<vmem>>, vector<128x128xf32>
    %cst_7 = arith.constant dense<0.000000e+00> : vector<128x128xf32>
    %7 = tpu.matmul %5, %6, %cst_7 {dimension_numbers = #tpu.dot_dimension_numbers<[1], [0], [0], [1], [0, 0, 1, 1], [], []>} : vector<128x128xf32>, vector<128x128xf32>, vector<128x128xf32> -> vector<128x128xf32>
    %c0_8 = arith.constant 0 : index
    %c0_9 = arith.constant 0 : index
    %8 = vector.load %arg5[%c0_8, %c0_9] : memref<1x128xf32, #tpu.memory_space<vmem>>, vector<1x128xf32>
    %9 = vector.broadcast %8 : vector<1x128xf32> to vector<128x128xf32>
    %10 = arith.addf %7, %9 : vector<128x128xf32>
    %c0_10 = arith.constant 0 : index
    %c0_11 = arith.constant 0 : index
    %11 = vector.load %arg6[%c0_10, %c0_11] : memref<128x128xf32, #tpu.memory_space<vmem>>, vector<128x128xf32>
    tpu.vector_store %arg6[%c0_10, %c0_11], %10 {strides = array<i32>} : memref<128x128xf32, #tpu.memory_space<vmem>>, vector<128x128xf32>,
    return
  }
  func.func @transform_0(%arg0: i32) -> (i32, i32) {
    %c0_i32 = arith.constant 0 : i32
    %c0_i32_0 = arith.constant 0 : i32
    return %arg0, %c0_i32 : i32, i32
  }
  func.func @transform_1(%arg0: i32) -> (i32, i32) {
    %c0_i32 = arith.constant 0 : i32
    %c0_i32_0 = arith.constant 0 : i32
    %c0_i32_1 = arith.constant 0 : i32
    return %c0_i32, %c0_i32_0 : i32, i32
  }
  func.func @transform_2(%arg0: i32) -> (i32, i32) {
    %c0_i32 = arith.constant 0 : i32
    %c0_i32_0 = arith.constant 0 : i32
    %c0_i32_1 = arith.constant 0 : i32
    return %c0_i32, %c0_i32_0 : i32, i32
  }
  func.func @transform_3(%arg0: i32) -> (i32, i32) {
    %c0_i32 = arith.constant 0 : i32
    %c0_i32_0 = arith.constant 0 : i32
    %c0_i32_1 = arith.constant 0 : i32
    return %c0_i32, %c0_i32_0 : i32, i32
  }
  func.func @transform_4(%arg0: i32) -> (i32, i32) {
    %c0_i32 = arith.constant 0 : i32
    %c0_i32_0 = arith.constant 0 : i32
    %c0_i32_1 = arith.constant 0 : i32
    return %c0_i32, %c0_i32_0 : i32, i32
  }
  func.func @transform_5(%arg0: i32) -> (i32, i32) {
    %c0_i32 = arith.constant 0 : i32
    %c0_i32_0 = arith.constant 0 : i32
    return %arg0, %c0_i32 : i32, i32
  }
}

</mosaic_0001>

<llo_original>
// kernel: linear_pca_forward.1
$region0: #{linear_pca_forward.1}
  #allocation0 [shape = 'u32[]', space=smem, size = 0x4, offset = 0x4, fixed_abs, tag = 'smem constant byte address 0x4 - core index']
  #allocation1 [shape = 'u32[144,128]{1,0:T(1,128)}', space=vmem, size = 0x12000, scoped, tag = 'internal scratch']
  %s0 = inlined_call_operand.vmem [shape: f32[128,128], index: 0, kind: input, shape index: {}]
  %s1 = inlined_call_operand.vmem [shape: f32[128,128], index: 1, kind: input, shape index: {}]
  %s2 = inlined_call_operand.vmem [shape: f32[1,128], index: 2, kind: input, shape index: {}]
  %s3 = inlined_call_operand.vmem [shape: f32[128,128], index: 3, kind: input, shape index: {}]
  %s4 = inlined_call_operand.vmem [shape: f32[1,128], index: 4, kind: input, shape index: {}]
  %s5 = inlined_call_operand.vmem [shape: f32[128,128], index: 5, kind: output, shape index: {}]
  %s6 = sld [smem:[#allocation0]]
  $region30: #{linear_pca_forward.1} parent=0
    _
  %s8 = ssub.s32 1, %s6
  %s9 = scalar_select 0, %s8, %s6
  // Predicated region
  $region2: #{linear_pca_forward.1} parent=0 // pred_check
    _
  $region3: #{linear_pca_forward.1} parent=0 // pred_check_branch
    %11 = sbr.rel (0) target = $region5
  $region4: #{linear_pca_forward.1} parent=0 // pred_region
    _
  $region5: #{linear_pca_forward.1} parent=0 // pred_fallthru
    _
  // Predicated region
  $region6: #{linear_pca_forward.1} parent=0 // pred_check
    _
  $region7: #{linear_pca_forward.1} parent=0 // pred_check_branch
    %13 = sbr.rel (0) target = $region9
  $region8: #{linear_pca_forward.1} parent=0 // pred_region
    _
  $region9: #{linear_pca_forward.1} parent=0 // pred_fallthru
    _
  // Predicated region
  $region10: #{linear_pca_forward.1} parent=0 // pred_check
    _
  $region11: #{linear_pca_forward.1} parent=0 // pred_check_branch
    %15 = sbr.rel (0) target = $region13
  $region12: #{linear_pca_forward.1} parent=0 // pred_region
    _
  $region13: #{linear_pca_forward.1} parent=0 // pred_fallthru
    _
  // Predicated region
  $region14: #{linear_pca_forward.1} parent=0 // pred_check
    _
  $region15: #{linear_pca_forward.1} parent=0 // pred_check_branch
    %17 = sbr.rel (0) target = $region17
  $region16: #{linear_pca_forward.1} parent=0 // pred_region
    _
  $region17: #{linear_pca_forward.1} parent=0 // pred_fallthru
    _
  // Predicated region
  $region18: #{linear_pca_forward.1} parent=0 // pred_check
    _
  $region19: #{linear_pca_forward.1} parent=0 // pred_check_branch
    %19 = sbr.rel (0) target = $region21
  $region20: #{linear_pca_forward.1} parent=0 // pred_region
    _
  $region21: #{linear_pca_forward.1} parent=0 // pred_fallthru
    _
  %v20 = vld [vmem:[%s0] sm:$0xff]
  %v21 = vld [vmem:[%s0 + $0x8] sm:$0xff]
  %v22 = vld [vmem:[%s0 + $0x10] sm:$0xff]
  %v23 = vld [vmem:[%s0 + $0x18] sm:$0xff]
  %v24 = vld [vmem:[%s0 + $0x20] sm:$0xff]
  %v25 = vld [vmem:[%s0 + $0x28] sm:$0xff]
  %v26 = vld [vmem:[%s0 + $0x30] sm:$0xff]
  %v27 = vld [vmem:[%s0 + $0x38] sm:$0xff]
  %v28 = vld [vmem:[%s0 + $0x40] sm:$0xff]
  %v29 = vld [vmem:[%s0 + $0x48] sm:$0xff]
  %v30 = vld [vmem:[%s0 + $0x50] sm:$0xff]
  %v31 = vld [vmem:[%s0 + $0x58] sm:$0xff]
  %v32 = vld [vmem:[%s0 + $0x60] sm:$0xff]
  %v33 = vld [vmem:[%s0 + $0x68] sm:$0xff]
  %v34 = vld [vmem:[%s0 + $0x70] sm:$0xff]
  %v35 = vld [vmem:[%s0 + $0x78] sm:$0xff]
  %v36 = vld [vmem:[%s1] sm:$0xff]
  %v37 = vld [vmem:[%s1 + $0x8] sm:$0xff]
  %v38 = vld [vmem:[%s1 + $0x10] sm:$0xff]
  %v39 = vld [vmem:[%s1 + $0x18] sm:$0xff]
  %v40 = vld [vmem:[%s1 + $0x20] sm:$0xff]
  %v41 = vld [vmem:[%s1 + $0x28] sm:$0xff]
  %v42 = vld [vmem:[%s1 + $0x30] sm:$0xff]
  %v43 = vld [vmem:[%s1 + $0x38] sm:$0xff]
  %v44 = vld [vmem:[%s1 + $0x40] sm:$0xff]
  %v45 = vld [vmem:[%s1 + $0x48] sm:$0xff]
  %v46 = vld [vmem:[%s1 + $0x50] sm:$0xff]
  %v47 = vld [vmem:[%s1 + $0x58] sm:$0xff]
  %v48 = vld [vmem:[%s1 + $0x60] sm:$0xff]
  %v49 = vld [vmem:[%s1 + $0x68] sm:$0xff]
  %v50 = vld [vmem:[%s1 + $0x70] sm:$0xff]
  %v51 = vld [vmem:[%s1 + $0x78] sm:$0xff]
  %v52 = vld [vmem:[%s2] sm:$0x1]
  %v54 = vlaneseq
  %v55 = vshrl.u32 %v54, 7
  %v56 = vsub.s32 0, %v55
  %v57 = vrot.slane %v52, %v56
  %59 = vmatprep.subr.mxu0 0.0
  %60 = vmatpush1.msra.mxu0 %v36
  %61 = vmatprep.subr.mxu0 0.0
  %62 = vmatpush1.msra.mxu0 %v37
  %63 = vmatprep.subr.mxu0 0.0
  %64 = vmatpush1.msra.mxu0 %v38
  %65 = vmatprep.subr.mxu0 0.0
  %66 = vmatpush1.msra.mxu0 %v39
  %67 = vmatprep.subr.mxu0 0.0
  %68 = vmatpush1.msra.mxu0 %v40
  %69 = vmatprep.subr.mxu0 0.0
  %70 = vmatpush1.msra.mxu0 %v41
  %71 = vmatprep.subr.mxu0 0.0
  %72 = vmatpush1.msra.mxu0 %v42
  %73 = vmatprep.subr.mxu0 0.0
  %74 = vmatpush1.msra.mxu0 %v43
  %75 = vmatprep.subr.mxu0 0.0
  %76 = vmatpush1.msra.mxu0 %v44
  %77 = vmatprep.subr.mxu0 0.0
  %78 = vmatpush1.msra.mxu0 %v45
  %79 = vmatprep.subr.mxu0 0.0
  %80 = vmatpush1.msra.mxu0 %v46
  %81 = vmatprep.subr.mxu0 0.0
  %82 = vmatpush1.msra.mxu0 %v47
  %83 = vmatprep.subr.mxu0 0.0
  %84 = vmatpush1.msra.mxu0 %v48
  %85 = vmatprep.subr.mxu0 0.0
  %86 = vmatpush1.msra.mxu0 %v49
  %87 = vmatprep.subr.mxu0 0.0
  %88 = vmatpush1.msra.mxu0 %v50
  %89 = vmatprep.subr.mxu0 0.0
  %90 = vmatpush1.msra.mxu0 %v51
  %91 = vmatprep.subr.mxu0 0.0
  %92 = vmatpush1.msra.mxu0 0.0
  %93 = vmatprep.subr.mxu0 0.0
  %94 = vmatpush1.msra.mxu0 0.0
  %95 = vmatprep.subr.mxu0 0.0
  %96 = vmatpush1.msra.mxu0 0.0
  %97 = vmatprep.subr.mxu0 0.0
  %98 = vmatpush1.msra.mxu0 0.0
  %99 = vmatprep.subr.mxu0 0.0
  %100 = vmatpush1.msra.mxu0 0.0
  %101 = vmatprep.subr.mxu0 0.0
  %102 = vmatpush1.msra.mxu0 0.0
  %103 = vmatprep.subr.mxu0 0.0
  %104 = vmatpush1.msra.mxu0 0.0
  %105 = vmatprep.subr.mxu0 0.0
  %106 = vmatpush1.msra.mxu0 0.0
  %107 = vmatprep.subr.mxu0 0.0
  %108 = vmatpush1.msra.mxu0 0.0
  %109 = vmatprep.subr.mxu0 0.0
  %110 = vmatpush1.msra.mxu0 0.0
  %111 = vmatprep.subr.mxu0 0.0
  %112 = vmatpush1.msra.mxu0 0.0
  %113 = vmatprep.subr.mxu0 0.0
  %114 = vmatpush1.msra.mxu0 0.0
  %115 = vmatprep.subr.mxu0 0.0
  %116 = vmatpush1.msra.mxu0 0.0
  %117 = vmatprep.subr.mxu0 0.0
  %118 = vmatpush1.msra.mxu0 0.0
  %119 = vmatprep.subr.mxu0 0.0
  %120 = vmatpush1.msra.mxu0 0.0
  %121 = vmatprep.subr.mxu0 0.0
  %122 = vmatpush1.msra.mxu0 0.0
  %123 = vmatprep.mubr.f32.mxu0 0.0
  %124 = vmatmul.mubr.f32.gmra.mrb[0].mxu0 %v20
  %v125 = vpop.f32.mrb[0].mxu0
  %v126 = vadd.f32 %v57, %v125
  %v127 = vpop.f32.mrb[0].mxu0
  %128 = vmatprep.mubr.f32.mxu0 0.0
  %129 = vmatmul.mubr.f32.gmra.mrb[0].mxu0 %v21
  %v130 = vpop.f32.mrb[0].mxu0
  %v131 = vadd.f32 %v57, %v130
  %v132 = vpop.f32.mrb[0].mxu0
  %133 = vmatprep.mubr.f32.mxu0 0.0
  %134 = vmatmul.mubr.f32.gmra.mrb[0].mxu0 %v22
  %v135 = vpop.f32.mrb[0].mxu0
  %v136 = vadd.f32 %v57, %v135
  %v137 = vpop.f32.mrb[0].mxu0
  %138 = vmatprep.mubr.f32.mxu0 0.0
  %139 = vmatmul.mubr.f32.gmra.mrb[0].mxu0 %v23
  %v140 = vpop.f32.mrb[0].mxu0
  %v141 = vadd.f32 %v57, %v140
  %v142 = vpop.f32.mrb[0].mxu0
  %143 = vmatprep.mubr.f32.mxu0 0.0
  %144 = vmatmul.mubr.f32.gmra.mrb[0].mxu0 %v24
  %v145 = vpop.f32.mrb[0].mxu0
  %v146 = vadd.f32 %v57, %v145
  %v147 = vpop.f32.mrb[0].mxu0
  %148 = vmatprep.mubr.f32.mxu0 0.0
  %149 = vmatmul.mubr.f32.gmra.mrb[0].mxu0 %v25
  %v150 = vpop.f32.mrb[0].mxu0
  %v151 = vadd.f32 %v57, %v150
  %v152 = vpop.f32.mrb[0].mxu0
  %153 = vmatprep.mubr.f32.mxu0 0.0
  %154 = vmatmul.mubr.f32.gmra.mrb[0].mxu0 %v26
  %v155 = vpop.f32.mrb[0].mxu0
  %v156 = vadd.f32 %v57, %v155
  %v157 = vpop.f32.mrb[0].mxu0
  %158 = vmatprep.mubr.f32.mxu0 0.0
  %159 = vmatmul.mubr.f32.gmra.mrb[0].mxu0 %v27
  %v160 = vpop.f32.mrb[0].mxu0
  %v161 = vadd.f32 %v57, %v160
  %v162 = vpop.f32.mrb[0].mxu0
  %163 = vmatprep.mubr.f32.mxu0 0.0
  %164 = vmatmul.mubr.f32.gmra.mrb[0].mxu0 %v28
  %v165 = vpop.f32.mrb[0].mxu0
  %v166 = vadd.f32 %v57, %v165
  %v167 = vpop.f32.mrb[0].mxu0
  %168 = vmatprep.mubr.f32.mxu0 0.0
  %169 = vmatmul.mubr.f32.gmra.mrb[0].mxu0 %v29
  %v170 = vpop.f32.mrb[0].mxu0
  %v171 = vadd.f32 %v57, %v170
  %v172 = vpop.f32.mrb[0].mxu0
  %173 = vmatprep.mubr.f32.mxu0 0.0
  %174 = vmatmul.mubr.f32.gmra.mrb[0].mxu0 %v30
  %v175 = vpop.f32.mrb[0].mxu0
  %v176 = vadd.f32 %v57, %v175
  %v177 = vpop.f32.mrb[0].mxu0
  %178 = vmatprep.mubr.f32.mxu0 0.0
  %179 = vmatmul.mubr.f32.gmra.mrb[0].mxu0 %v31
  %v180 = vpop.f32.mrb[0].mxu0
  %v181 = vadd.f32 %v57, %v180
  %v182 = vpop.f32.mrb[0].mxu0
  %183 = vmatprep.mubr.f32.mxu0 0.0
  %184 = vmatmul.mubr.f32.gmra.mrb[0].mxu0 %v32
  %v185 = vpop.f32.mrb[0].mxu0
  %v186 = vadd.f32 %v57, %v185
  %v187 = vpop.f32.mrb[0].mxu0
  %188 = vmatprep.mubr.f32.mxu0 0.0
  %189 = vmatmul.mubr.f32.gmra.mrb[0].mxu0 %v33
  %v190 = vpop.f32.mrb[0].mxu0
  %v191 = vadd.f32 %v57, %v190
  %v192 = vpop.f32.mrb[0].mxu0
  %193 = vmatprep.mubr.f32.mxu0 0.0
  %194 = vmatmul.mubr.f32.gmra.mrb[0].mxu0 %v34
  %v195 = vpop.f32.mrb[0].mxu0
  %v196 = vadd.f32 %v57, %v195
  %v197 = vpop.f32.mrb[0].mxu0
  %198 = vmatprep.mubr.f32.mxu0 0.0
  %199 = vmatmul.mubr.f32.gmra.mrb[0].mxu0 %v35
  %v200 = vpop.f32.mrb[0].mxu0
  %v201 = vadd.f32 %v57, %v200
  %v202 = vpop.f32.mrb[0].mxu0
  %203 = vdwg.mxu0
  %v204 = vld [vmem:[%s3] sm:$0xff]
  %v205 = vld [vmem:[%s3 + $0x8] sm:$0xff]
  %v206 = vld [vmem:[%s3 + $0x10] sm:$0xff]
  %v207 = vld [vmem:[%s3 + $0x18] sm:$0xff]
  %v208 = vld [vmem:[%s3 + $0x20] sm:$0xff]
  %v209 = vld [vmem:[%s3 + $0x28] sm:$0xff]
  %v210 = vld [vmem:[%s3 + $0x30] sm:$0xff]
  %v211 = vld [vmem:[%s3 + $0x38] sm:$0xff]
  %v212 = vld [vmem:[%s3 + $0x40] sm:$0xff]
  %v213 = vld [vmem:[%s3 + $0x48] sm:$0xff]
  %v214 = vld [vmem:[%s3 + $0x50] sm:$0xff]
  %v215 = vld [vmem:[%s3 + $0x58] sm:$0xff]
  %v216 = vld [vmem:[%s3 + $0x60] sm:$0xff]
  %v217 = vld [vmem:[%s3 + $0x68] sm:$0xff]
  %v218 = vld [vmem:[%s3 + $0x70] sm:$0xff]
  %v219 = vld [vmem:[%s3 + $0x78] sm:$0xff]
  %v220 = vld [vmem:[%s4] sm:$0x1]
  %v222 = vlaneseq
  %v223 = vshrl.u32 %v222, 7
  %v224 = vsub.s32 0, %v223
  %v225 = vrot.slane %v220, %v224
  %227 = vmatprep.subr.mxu0 0.0
  %228 = vmatpush1.msra.mxu0 %v204
  %229 = vmatprep.subr.mxu0 0.0
  %230 = vmatpush1.msra.mxu0 %v205
  %231 = vmatprep.subr.mxu0 0.0
  %232 = vmatpush1.msra.mxu0 %v206
  %233 = vmatprep.subr.mxu0 0.0
  %234 = vmatpush1.msra.mxu0 %v207
  %235 = vmatprep.subr.mxu0 0.0
  %236 = vmatpush1.msra.mxu0 %v208
  %237 = vmatprep.subr.mxu0 0.0
  %238 = vmatpush1.msra.mxu0 %v209
  %239 = vmatprep.subr.mxu0 0.0
  %240 = vmatpush1.msra.mxu0 %v210
  %241 = vmatprep.subr.mxu0 0.0
  %242 = vmatpush1.msra.mxu0 %v211
  %243 = vmatprep.subr.mxu0 0.0
  %244 = vmatpush1.msra.mxu0 %v212
  %245 = vmatprep.subr.mxu0 0.0
  %246 = vmatpush1.msra.mxu0 %v213
  %247 = vmatprep.subr.mxu0 0.0
  %248 = vmatpush1.msra.mxu0 %v214
  %249 = vmatprep.subr.mxu0 0.0
  %250 = vmatpush1.msra.mxu0 %v215
  %251 = vmatprep.subr.mxu0 0.0
  %252 = vmatpush1.msra.mxu0 %v216
  %253 = vmatprep.subr.mxu0 0.0
  %254 = vmatpush1.msra.mxu0 %v217
  %255 = vmatprep.subr.mxu0 0.0
  %256 = vmatpush1.msra.mxu0 %v218
  %257 = vmatprep.subr.mxu0 0.0
  %258 = vmatpush1.msra.mxu0 %v219
  %259 = vmatprep.subr.mxu0 0.0
  %260 = vmatpush1.msra.mxu0 0.0
  %261 = vmatprep.subr.mxu0 0.0
  %262 = vmatpush1.msra.mxu0 0.0
  %263 = vmatprep.subr.mxu0 0.0
  %264 = vmatpush1.msra.mxu0 0.0
  %265 = vmatprep.subr.mxu0 0.0
  %266 = vmatpush1.msra.mxu0 0.0
  %267 = vmatprep.subr.mxu0 0.0
  %268 = vmatpush1.msra.mxu0 0.0
  %269 = vmatprep.subr.mxu0 0.0
  %270 = vmatpush1.msra.mxu0 0.0
  %271 = vmatprep.subr.mxu0 0.0
  %272 = vmatpush1.msra.mxu0 0.0
  %273 = vmatprep.subr.mxu0 0.0
  %274 = vmatpush1.msra.mxu0 0.0
  %275 = vmatprep.subr.mxu0 0.0
  %276 = vmatpush1.msra.mxu0 0.0
  %277 = vmatprep.subr.mxu0 0.0
  %278 = vmatpush1.msra.mxu0 0.0
  %279 = vmatprep.subr.mxu0 0.0
  %280 = vmatpush1.msra.mxu0 0.0
  %281 = vmatprep.subr.mxu0 0.0
  %282 = vmatpush1.msra.mxu0 0.0
  %283 = vmatprep.subr.mxu0 0.0
  %284 = vmatpush1.msra.mxu0 0.0
  %285 = vmatprep.subr.mxu0 0.0
  %286 = vmatpush1.msra.mxu0 0.0
  %287 = vmatprep.subr.mxu0 0.0
  %288 = vmatpush1.msra.mxu0 0.0
  %289 = vmatprep.subr.mxu0 0.0
  %290 = vmatpush1.msra.mxu0 0.0
  %291 = vmatprep.mubr.f32.mxu0 0.0
  %292 = vmatmul.mubr.f32.gmra.mrb[0].mxu0 %v126
  %v293 = vpop.f32.mrb[0].mxu0
  %v294 = vadd.f32 %v225, %v293
  %v295 = vpop.f32.mrb[0].mxu0
  %296 = vmatprep.mubr.f32.mxu0 0.0
  %297 = vmatmul.mubr.f32.gmra.mrb[0].mxu0 %v131
  %v298 = vpop.f32.mrb[0].mxu0
  %v299 = vadd.f32 %v225, %v298
  %v300 = vpop.f32.mrb[0].mxu0
  %301 = vmatprep.mubr.f32.mxu0 0.0
  %302 = vmatmul.mubr.f32.gmra.mrb[0].mxu0 %v136
  %v303 = vpop.f32.mrb[0].mxu0
  %v304 = vadd.f32 %v225, %v303
  %v305 = vpop.f32.mrb[0].mxu0
  %306 = vmatprep.mubr.f32.mxu0 0.0
  %307 = vmatmul.mubr.f32.gmra.mrb[0].mxu0 %v141
  %v308 = vpop.f32.mrb[0].mxu0
  %v309 = vadd.f32 %v225, %v308
  %v310 = vpop.f32.mrb[0].mxu0
  %311 = vmatprep.mubr.f32.mxu0 0.0
  %312 = vmatmul.mubr.f32.gmra.mrb[0].mxu0 %v146
  %v313 = vpop.f32.mrb[0].mxu0
  %v314 = vadd.f32 %v225, %v313
  %v315 = vpop.f32.mrb[0].mxu0
  %316 = vmatprep.mubr.f32.mxu0 0.0
  %317 = vmatmul.mubr.f32.gmra.mrb[0].mxu0 %v151
  %v318 = vpop.f32.mrb[0].mxu0
  %v319 = vadd.f32 %v225, %v318
  %v320 = vpop.f32.mrb[0].mxu0
  %321 = vmatprep.mubr.f32.mxu0 0.0
  %322 = vmatmul.mubr.f32.gmra.mrb[0].mxu0 %v156
  %v323 = vpop.f32.mrb[0].mxu0
  %v324 = vadd.f32 %v225, %v323
  %v325 = vpop.f32.mrb[0].mxu0
  %326 = vmatprep.mubr.f32.mxu0 0.0
  %327 = vmatmul.mubr.f32.gmra.mrb[0].mxu0 %v161
  %v328 = vpop.f32.mrb[0].mxu0
  %v329 = vadd.f32 %v225, %v328
  %v330 = vpop.f32.mrb[0].mxu0
  %331 = vmatprep.mubr.f32.mxu0 0.0
  %332 = vmatmul.mubr.f32.gmra.mrb[0].mxu0 %v166
  %v333 = vpop.f32.mrb[0].mxu0
  %v334 = vadd.f32 %v225, %v333
  %v335 = vpop.f32.mrb[0].mxu0
  %336 = vmatprep.mubr.f32.mxu0 0.0
  %337 = vmatmul.mubr.f32.gmra.mrb[0].mxu0 %v171
  %v338 = vpop.f32.mrb[0].mxu0
  %v339 = vadd.f32 %v225, %v338
  %v340 = vpop.f32.mrb[0].mxu0
  %341 = vmatprep.mubr.f32.mxu0 0.0
  %342 = vmatmul.mubr.f32.gmra.mrb[0].mxu0 %v176
  %v343 = vpop.f32.mrb[0].mxu0
  %v344 = vadd.f32 %v225, %v343
  %v345 = vpop.f32.mrb[0].mxu0
  %346 = vmatprep.mubr.f32.mxu0 0.0
  %347 = vmatmul.mubr.f32.gmra.mrb[0].mxu0 %v181
  %v348 = vpop.f32.mrb[0].mxu0
  %v349 = vadd.f32 %v225, %v348
  %v350 = vpop.f32.mrb[0].mxu0
  %351 = vmatprep.mubr.f32.mxu0 0.0
  %352 = vmatmul.mubr.f32.gmra.mrb[0].mxu0 %v186
  %v353 = vpop.f32.mrb[0].mxu0
  %v354 = vadd.f32 %v225, %v353
  %v355 = vpop.f32.mrb[0].mxu0
  %356 = vmatprep.mubr.f32.mxu0 0.0
  %357 = vmatmul.mubr.f32.gmra.mrb[0].mxu0 %v191
  %v358 = vpop.f32.mrb[0].mxu0
  %v359 = vadd.f32 %v225, %v358
  %v360 = vpop.f32.mrb[0].mxu0
  %361 = vmatprep.mubr.f32.mxu0 0.0
  %362 = vmatmul.mubr.f32.gmra.mrb[0].mxu0 %v196
  %v363 = vpop.f32.mrb[0].mxu0
  %v364 = vadd.f32 %v225, %v363
  %v365 = vpop.f32.mrb[0].mxu0
  %366 = vmatprep.mubr.f32.mxu0 0.0
  %367 = vmatmul.mubr.f32.gmra.mrb[0].mxu0 %v201
  %v368 = vpop.f32.mrb[0].mxu0
  %v369 = vadd.f32 %v225, %v368
  %v370 = vpop.f32.mrb[0].mxu0
  %371 = vdwg.mxu0
  %372 = vst [vmem:[%s5] sm:$0xff] %v294
  %373 = vst [vmem:[%s5 + $0x8] sm:$0xff] %v299
  %374 = vst [vmem:[%s5 + $0x10] sm:$0xff] %v304
  %375 = vst [vmem:[%s5 + $0x18] sm:$0xff] %v309
  %376 = vst [vmem:[%s5 + $0x20] sm:$0xff] %v314
  %377 = vst [vmem:[%s5 + $0x28] sm:$0xff] %v319
  %378 = vst [vmem:[%s5 + $0x30] sm:$0xff] %v324
  %379 = vst [vmem:[%s5 + $0x38] sm:$0xff] %v329
  %380 = vst [vmem:[%s5 + $0x40] sm:$0xff] %v334
  %381 = vst [vmem:[%s5 + $0x48] sm:$0xff] %v339
  %382 = vst [vmem:[%s5 + $0x50] sm:$0xff] %v344
  %383 = vst [vmem:[%s5 + $0x58] sm:$0xff] %v349
  %384 = vst [vmem:[%s5 + $0x60] sm:$0xff] %v354
  %385 = vst [vmem:[%s5 + $0x68] sm:$0xff] %v359
  %386 = vst [vmem:[%s5 + $0x70] sm:$0xff] %v364
  %387 = vst [vmem:[%s5 + $0x78] sm:$0xff] %v369
  // Predicated region
  $region22: #{linear_pca_forward.1} parent=0 // pred_check
    _
  $region23: #{linear_pca_forward.1} parent=0 // pred_check_branch
    %389 = sbr.rel (0) target = $region25
  $region24: #{linear_pca_forward.1} parent=0 // pred_region
    _
  $region25: #{linear_pca_forward.1} parent=0 // pred_fallthru
    _
  // Predicated region
  $region26: #{linear_pca_forward.1} parent=0 // pred_check
    _
  $region27: #{linear_pca_forward.1} parent=0 // pred_check_branch
    %391 = sbr.rel (0) target = $region29
  $region28: #{linear_pca_forward.1} parent=0 // pred_region
    _
  $region29: #{linear_pca_forward.1} parent=0 // pred_fallthru
    _

</llo_original>
